<compile_context>
chip_gen: v5e
topology: v5e:2x2
jax: 0.10.0
libtpu: 0.0.40
codegen_flags: <defaults>
</compile_context>

<pallas_src>
import functools

import jax
import jax.numpy as jnp
from jax.experimental import pallas as pl
from jax.experimental.pallas import tpu as pltpu


def _attention_block_kernel(xv_ref, xa_ref, xp_ref, w_ref, b_ref, o_ref, *,
                            tile_n, n_rows):
    # xv/xa/xp: (tile_n, D) VMEM (native dtype); w: (1, D) VMEM; b: (1,) SMEM.
    w = w_ref[...].astype(jnp.float32)          # (1, D)
    b = b_ref[0]                                # scalar from SMEM

    xv = xv_ref[...]
    xa = xa_ref[...]
    xp = xp_ref[...]

    def logit(x):
        # f32 accumulation inside the lane reduce; the elementwise product is
        # fused into the reduction, so no full-tile f32 copy stays live.
        s = jnp.sum(x.astype(jnp.float32) * w, axis=-1, keepdims=True) + b
        return jnp.maximum(s, 0.0)              # ReLU(<x, w> + b), (tile_n, 1)

    sv = logit(xv)
    sa = logit(xa)
    sp = logit(xp)

    # Ragged last tile: out-of-bounds rows are dropped on writeback by Pallas,
    # but zero their logits so exp() never sees garbage (keeps math finite).
    if n_rows % tile_n != 0:
        row = (pl.program_id(0) * tile_n
               + jax.lax.broadcasted_iota(jnp.int32, (tile_n, 1), 0))
        valid = row < n_rows
        sv = jnp.where(valid, sv, 0.0)
        sa = jnp.where(valid, sa, 0.0)
        sp = jnp.where(valid, sp, 0.0)

    # Numerically stable softmax over the 3 modalities.
    m = jnp.maximum(jnp.maximum(sv, sa), sp)
    ev = jnp.exp(sv - m)
    ea = jnp.exp(sa - m)
    ep = jnp.exp(sp - m)
    inv_denom = pl.reciprocal(ev + ea + ep, approx=False)   # exact; HBM-bound

    av = (ev * inv_denom).astype(xv.dtype)
    aa = (ea * inv_denom).astype(xv.dtype)
    ap = (ep * inv_denom).astype(xv.dtype)

    # Weighted sum over modalities in the native dtype (broadcast (n,1)*(n,D)).
    o_ref[...] = (av * xv + aa * xa + ap * xp).astype(o_ref.dtype)


def _vmem_budget():
    """Generation-aware VMEM limit + streamed-buffer budget (bytes)."""
    try:
        info = pltpu.get_tpu_info()
        cap = int(getattr(info, "vmem_capacity_bytes", 64 * 1024 * 1024))
    except Exception:
        cap = 64 * 1024 * 1024          # conservative: v7x per-TC VMEM
    # Scoped limit: 3/4 of physical, capped at 100 MiB (v5e/v6e: 96 MiB,
    # v7x: 48 MiB).  Streams get ~55% of that; the rest is headroom for the
    # fused f32 reduction temps and compiler scratch.
    vmem_limit = min(cap * 3 // 4, 100 * 1024 * 1024)
    stream_budget = vmem_limit * 11 // 20
    return int(vmem_limit), int(stream_budget)


def _choose_tile_n(N, D, itemsize, stream_budget_bytes):
    """Largest row tile s.t. 4 streamed arrays x 2 buffers fit the budget."""
    bytes_per_row = 4 * 2 * D * itemsize        # (3 in + 1 out) double-buffered
    max_rows = max(8, stream_budget_bytes // bytes_per_row)
    n_rounded = ((N + 7) // 8) * 8              # don't over-allocate tiny problems
    tile_n = min(int(max_rows), n_rounded)
    tile_n = max(8, (tile_n // 8) * 8)          # sublane multiple
    return int(tile_n)


def attention_block(x_v, x_a, x_p, w, b, *, tile_n=None):
    """x_v, x_a, x_p: [B, T, D]; w: [D, 1]; b: scalar -> out [B, T, D]."""
    B, T, D = x_v.shape
    N = B * T
    itemsize = jnp.dtype(x_v.dtype).itemsize
    vmem_limit, stream_budget = _vmem_budget()
    if tile_n is None:
        tile_n = _choose_tile_n(N, D, itemsize, stream_budget)
    assert tile_n % 8 == 0, "tile_n must be a multiple of 8 (sublane)"

    xv2 = x_v.reshape(N, D)
    xa2 = x_a.reshape(N, D)
    xp2 = x_p.reshape(N, D)

    num_tiles = pl.cdiv(N, tile_n)              # ragged tail handled in-kernel

    w_row = jnp.asarray(w, jnp.float32).reshape(1, D)     # weight as a lane row
    b1 = jnp.asarray(b, jnp.float32).reshape(1)           # bias scalar -> SMEM

    row_spec = pl.BlockSpec((tile_n, D), lambda i: (i, 0))

    kernel = functools.partial(_attention_block_kernel, tile_n=tile_n, n_rows=N)

    cost = pl.CostEstimate(
        flops=11 * N * D,                       # 3x (mul+add reduce) + weighted sum
        transcendentals=3 * N,                  # 3 exps per row
        bytes_accessed=4 * N * D * itemsize,    # 3 inputs + 1 output streamed once
    )

    out = pl.pallas_call(
        kernel,
        out_shape=jax.ShapeDtypeStruct((N, D), x_v.dtype),
        grid_spec=pltpu.PrefetchScalarGridSpec(
            num_scalar_prefetch=0,
            grid=(num_tiles,),
            in_specs=[
                row_spec,                                            # x_v rows
                row_spec,                                            # x_a rows
                row_spec,                                            # x_p rows
                pl.BlockSpec((1, D), lambda i: (0, 0)),              # weight row
                pl.BlockSpec(memory_space=pltpu.MemorySpace.SMEM),   # bias scalar
            ],
            out_specs=row_spec,
        ),
        compiler_params=pltpu.CompilerParams(
            dimension_semantics=("parallel",),   # shards row-tiles across TCs
            vmem_limit_bytes=vmem_limit,
        ),
        cost_estimate=cost,
    )(xv2, xa2, xp2, w_row, b1)

    return out.reshape(B, T, D)


def _reference(x_v, x_a, x_p, w, b):
    x = jnp.stack([x_v, x_a, x_p], axis=2)                       # [B, T, 3, D]
    s = jnp.maximum(jnp.einsum("btmd,do->btmo", x, w) + b, 0.0)  # [B, T, 3, 1]
    s = jnp.squeeze(s, -1)                                       # [B, T, 3]
    att = jax.nn.softmax(s, axis=2)[..., None]                   # [B, T, 3, 1]
    return jnp.sum(x * att, axis=2)


if __name__ == "__main__":
    # Small shapes: batch=2, seq=8, hidden=32 (input_dim=32).
    B, T, D = 2, 8, 32
    key = jax.random.PRNGKey(0)
    k1, k2, k3, k4, k5 = jax.random.split(key, 5)

    x_v = jax.random.normal(k1, (B, T, D), dtype=jnp.float32)
    x_a = jax.random.normal(k2, (B, T, D), dtype=jnp.float32)
    x_p = jax.random.normal(k3, (B, T, D), dtype=jnp.float32)

    # Deterministic Linear(D, 1) params (PyTorch-style uniform(-1/sqrt(D), 1/sqrt(D))).
    bound = 1.0 / (D ** 0.5)
    w = jax.random.uniform(k4, (D, 1), jnp.float32, minval=-bound, maxval=bound)
    b = jax.random.uniform(k5, (), jnp.float32, minval=-bound, maxval=bound)

    out = attention_block(x_v, x_a, x_p, w, b)
    out = jax.block_until_ready(out)
    ref = _reference(x_v, x_a, x_p, w, b)
    assert out.shape == (B, T, D)
    assert jnp.allclose(out, ref, rtol=1e-5, atol=1e-5), "mismatch vs reference"

    # Second check: non-divisible row count exercises the in-kernel ragged path
    # (no jnp.pad / slice in the wrapper anymore).
    B2, T2 = 3, 5
    xv2 = jax.random.normal(k1, (B2, T2, D), dtype=jnp.float32)
    xa2 = jax.random.normal(k2, (B2, T2, D), dtype=jnp.float32)
    xp2 = jax.random.normal(k3, (B2, T2, D), dtype=jnp.float32)
    out2 = jax.block_until_ready(attention_block(xv2, xa2, xp2, w, b, tile_n=8))
    ref2 = _reference(xv2, xa2, xp2, w, b)
    assert out2.shape == (B2, T2, D)
    assert jnp.allclose(out2, ref2, rtol=1e-5, atol=1e-5), "mismatch (ragged path)"

    print("KERNEL_OK")
</pallas_src>

<mosaic_0001>
module attributes {stable_mosaic.version = 11 : i64} {
  func.func @_attention_block_kernel(%arg0: i32, %arg1: memref<16x32xf32, #tpu.memory_space<vmem>>, %arg2: memref<16x32xf32, #tpu.memory_space<vmem>>, %arg3: memref<16x32xf32, #tpu.memory_space<vmem>>, %arg4: memref<1x32xf32, #tpu.memory_space<vmem>>, %arg5: memref<1xf32, #tpu.memory_space<smem>>, %arg6: memref<16x32xf32, #tpu.memory_space<vmem>>) attributes {dimension_semantics = [#tpu.dimension_semantics<parallel>], iteration_bounds = array<i64: 1>, scalar_prefetch = 0 : i64, scratch_operands = 0 : i64, tpu.core_type = #tpu.core_type<tc>, window_params = [{transform_indices = @transform_0, window_bounds = array<i64: 16, 32>}, {transform_indices = @transform_1, window_bounds = array<i64: 16, 32>}, {transform_indices = @transform_2, window_bounds = array<i64: 16, 32>}, {pipeline_mode = #tpu.pipeline_mode<synchronous>, transform_indices = @transform_3, window_bounds = array<i64: 1, 32>}, {transform_indices = @transform_4, window_bounds = array<i64: 1>}, {transform_indices = @transform_5, window_bounds = array<i64: 16, 32>}]} {
    %c0 = arith.constant 0 : index
    %c0_0 = arith.constant 0 : index
    %0 = vector.load %arg4[%c0, %c0_0] : memref<1x32xf32, #tpu.memory_space<vmem>>, vector<1x32xf32>
    %c0_1 = arith.constant 0 : index
    %1 = memref.load %arg5[%c0_1] : memref<1xf32, #tpu.memory_space<smem>>
    %c0_2 = arith.constant 0 : index
    %c0_3 = arith.constant 0 : index
    %2 = vector.load %arg1[%c0_2, %c0_3] : memref<16x32xf32, #tpu.memory_space<vmem>>, vector<16x32xf32>
    %c0_4 = arith.constant 0 : index
    %c0_5 = arith.constant 0 : index
    %3 = vector.load %arg2[%c0_4, %c0_5] : memref<16x32xf32, #tpu.memory_space<vmem>>, vector<16x32xf32>
    %c0_6 = arith.constant 0 : index
    %c0_7 = arith.constant 0 : index
    %4 = vector.load %arg3[%c0_6, %c0_7] : memref<16x32xf32, #tpu.memory_space<vmem>>, vector<16x32xf32>
    %5 = vector.broadcast %0 : vector<1x32xf32> to vector<16x32xf32>
    %6 = arith.mulf %2, %5 : vector<16x32xf32>
    %cst = arith.constant dense<0.000000e+00> : vector<16xf32>
    %7 = vector.multi_reduction <add>, %6, %cst [1] : vector<16x32xf32> to vector<16xf32>
    %8 = vector.shape_cast %7 : vector<16xf32> to vector<16x1xf32>
    %9 = vector.broadcast %1 : f32 to vector<16x1xf32>
    %10 = arith.addf %8, %9 : vector<16x1xf32>
    %cst_8 = arith.constant 0.000000e+00 : f32
    %11 = vector.broadcast %cst_8 : f32 to vector<16x1xf32>
    %12 = arith.maximumf %10, %11 : vector<16x1xf32>
    %13 = vector.broadcast %0 : vector<1x32xf32> to vector<16x32xf32>
    %14 = arith.mulf %3, %13 : vector<16x32xf32>
    %cst_9 = arith.constant dense<0.000000e+00> : vector<16xf32>
    %15 = vector.multi_reduction <add>, %14, %cst_9 [1] : vector<16x32xf32> to vector<16xf32>
    %16 = vector.shape_cast %15 : vector<16xf32> to vector<16x1xf32>
    %17 = vector.broadcast %1 : f32 to vector<16x1xf32>
    %18 = arith.addf %16, %17 : vector<16x1xf32>
    %cst_10 = arith.constant 0.000000e+00 : f32
    %19 = vector.broadcast %cst_10 : f32 to vector<16x1xf32>
    %20 = arith.maximumf %18, %19 : vector<16x1xf32>
    %21 = vector.broadcast %0 : vector<1x32xf32> to vector<16x32xf32>
    %22 = arith.mulf %4, %21 : vector<16x32xf32>
    %cst_11 = arith.constant dense<0.000000e+00> : vector<16xf32>
    %23 = vector.multi_reduction <add>, %22, %cst_11 [1] : vector<16x32xf32> to vector<16xf32>
    %24 = vector.shape_cast %23 : vector<16xf32> to vector<16x1xf32>
    %25 = vector.broadcast %1 : f32 to vector<16x1xf32>
    %26 = arith.addf %24, %25 : vector<16x1xf32>
    %cst_12 = arith.constant 0.000000e+00 : f32
    %27 = vector.broadcast %cst_12 : f32 to vector<16x1xf32>
    %28 = arith.maximumf %26, %27 : vector<16x1xf32>
    %29 = arith.maximumf %12, %20 : vector<16x1xf32>
    %30 = arith.maximumf %29, %28 : vector<16x1xf32>
    %31 = arith.subf %12, %30 : vector<16x1xf32>
    %32 = math.exp %31 : vector<16x1xf32>
    %33 = arith.subf %20, %30 : vector<16x1xf32>
    %34 = math.exp %33 : vector<16x1xf32>
    %35 = arith.subf %28, %30 : vector<16x1xf32>
    %36 = math.exp %35 : vector<16x1xf32>
    %37 = arith.addf %32, %34 : vector<16x1xf32>
    %38 = arith.addf %37, %36 : vector<16x1xf32>
    %39 = tpu.reciprocal %38 : vector<16x1xf32> -> vector<16x1xf32>
    %40 = arith.mulf %32, %39 : vector<16x1xf32>
    %41 = arith.mulf %34, %39 : vector<16x1xf32>
    %42 = arith.mulf %36, %39 : vector<16x1xf32>
    %43 = vector.broadcast %40 : vector<16x1xf32> to vector<16x32xf32>
    %44 = arith.mulf %43, %2 : vector<16x32xf32>
    %45 = vector.broadcast %41 : vector<16x1xf32> to vector<16x32xf32>
    %46 = arith.mulf %45, %3 : vector<16x32xf32>
    %47 = arith.addf %44, %46 : vector<16x32xf32>
    %48 = vector.broadcast %42 : vector<16x1xf32> to vector<16x32xf32>
    %49 = arith.mulf %48, %4 : vector<16x32xf32>
    %50 = arith.addf %47, %49 : vector<16x32xf32>
    %c0_13 = arith.constant 0 : index
    %c0_14 = arith.constant 0 : index
    %51 = vector.load %arg6[%c0_13, %c0_14] : memref<16x32xf32, #tpu.memory_space<vmem>>, vector<16x32xf32>
    tpu.vector_store %arg6[%c0_13, %c0_14], %50 {strides = array<i32>} : memref<16x32xf32, #tpu.memory_space<vmem>>, vector<16x32xf32>,
    return
  }
  func.func @transform_0(%arg0: i32) -> (i32, i32) {
    %c0_i32 = arith.constant 0 : i32
    %c0_i32_0 = arith.constant 0 : i32
    return %arg0, %c0_i32 : i32, i32
  }
  func.func @transform_1(%arg0: i32) -> (i32, i32) {
    %c0_i32 = arith.constant 0 : i32
    %c0_i32_0 = arith.constant 0 : i32
    return %arg0, %c0_i32 : i32, i32
  }
  func.func @transform_2(%arg0: i32) -> (i32, i32) {
    %c0_i32 = arith.constant 0 : i32
    %c0_i32_0 = arith.constant 0 : i32
    return %arg0, %c0_i32 : i32, i32
  }
  func.func @transform_3(%arg0: i32) -> (i32, i32) {
    %c0_i32 = arith.constant 0 : i32
    %c0_i32_0 = arith.constant 0 : i32
    %c0_i32_1 = arith.constant 0 : i32
    return %c0_i32, %c0_i32_0 : i32, i32
  }
  func.func @transform_4(%arg0: i32) -> i32 {
    %c0_i32 = arith.constant 0 : i32
    %c0_i32_0 = arith.constant 0 : i32
    return %c0_i32 : i32
  }
  func.func @transform_5(%arg0: i32) -> (i32, i32) {
    %c0_i32 = arith.constant 0 : i32
    %c0_i32_0 = arith.constant 0 : i32
    return %arg0, %c0_i32 : i32, i32
  }
}

</mosaic_0001>

<llo_original>
// kernel: tpu_custom_call.1
$region0: #{tpu_custom_call.1}
  #allocation0 [shape = 'u32[]', space=smem, size = 0x4, offset = 0x4, fixed_abs, tag = 'smem constant byte address 0x4 - core index']
  #allocation1 [shape = 'u32[72,128]{1,0:T(1,128)}', space=vmem, size = 0x9000, scoped, tag = 'internal scratch']
  #allocation2 [shape = 'f32[1]{0:T(128)S(6)}', space=smem, size = 0x200, scoped, tag = 'scoped memory for tpu_custom_call.1']
  %s0 = inlined_call_operand.hbm [shape: f32[16,32], index: 0, kind: input, shape index: {}]
  %s1 = inlined_call_operand.hbm [shape: f32[16,32], index: 1, kind: input, shape index: {}]
  %s2 = inlined_call_operand.hbm [shape: f32[16,32], index: 2, kind: input, shape index: {}]
  %s3 = inlined_call_operand.vmem [shape: f32[1,32], index: 3, kind: input, shape index: {}]
  %s4 = inlined_call_operand.<no memory space> [shape: f32[1], index: 4, kind: input, shape index: {}]
  %s5 = inlined_call_operand.hbm [shape: f32[16,32], index: 5, kind: output, shape index: {}]
  %s6 = sld [smem:[#allocation0]]
  $region42: #{tpu_custom_call.1} parent=0
    _
  %s8 = ssub.s32 1, %s6
  %s9 = scalar_select 0, %s8, %s6
  %10 = sst [smem:[#allocation2]] %s4
  $region1: #{tpu_custom_call.1} parent=0
    #allocation3 [shape = 'u8[8192]{0}', space=vmem, size = 0x2000, scoped, tag = 'input window, operand 0, single buffered']
    #allocation4 [shape = 's32[1]{0}', space=sflag, size = 0x4, scoped, tag = 'scoped memory for tpu_custom_call.1']
    #allocation5 [shape = 's32[1]{0}', space=sflag, size = 0x4, scoped, tag = 'scoped memory for tpu_custom_call.1']
    #allocation6 [shape = 'u8[8192]{0}', space=vmem, size = 0x2000, scoped, tag = 'input window, operand 1, single buffered']
    #allocation7 [shape = 's32[1]{0}', space=sflag, size = 0x4, scoped, tag = 'scoped memory for tpu_custom_call.1']
    #allocation8 [shape = 'u8[8192]{0}', space=vmem, size = 0x2000, scoped, tag = 'input window, operand 2, single buffered']
    #allocation9 [shape = 'u8[8192]{0}', space=vmem, size = 0x2000, scoped, tag = 'output window, operand 0, single buffered']
    %11 = vsyncpa [#allocation4], 0
    %12 = vsyncpa [#allocation7], 0
    %13 = vsyncpa [#allocation5], 0
    // Predicated region
    $region2: #{tpu_custom_call.1} parent=1 // pred_check
      _
    $region3: #{tpu_custom_call.1} parent=1 // pred_check_branch
      %15 = sbr.rel (0) target = $region5
    $region4: #{tpu_custom_call.1} parent=1 // pred_region
      %17 = vsyncadd [#allocation4], 0
      %s18 = sshll.u32 %s0, 4
      %s19 = int_to_ptr.hbm [resolvable:$true] %s18
      %s20 = sshll.u32 [#allocation3], 4
      %s21 = int_to_ptr.vmem [resolvable:$true] %s20
      %26 = dma.hbm_to_vmem [thread:$0]  %s19, 256, %s21, [#allocation4], 128, 128, 8
    $region5: #{tpu_custom_call.1} parent=1 // pred_fallthru
      _
    // Predicated region
    $region6: #{tpu_custom_call.1} parent=1 // pred_check
      _
    $region7: #{tpu_custom_call.1} parent=1 // pred_check_branch
      %28 = sbr.rel (0) target = $region9
    $region8: #{tpu_custom_call.1} parent=1 // pred_region
      %30 = vsyncadd [#allocation7], 0
      %s31 = sshll.u32 %s1, 4
      %s32 = int_to_ptr.hbm [resolvable:$true] %s31
      %s33 = sshll.u32 [#allocation6], 4
      %s34 = int_to_ptr.vmem [resolvable:$true] %s33
      %39 = dma.hbm_to_vmem [thread:$0]  %s32, 256, %s34, [#allocation7], 128, 128, 8
    $region9: #{tpu_custom_call.1} parent=1 // pred_fallthru
      _
    // Predicated region
    $region10: #{tpu_custom_call.1} parent=1 // pred_check
      _
    $region11: #{tpu_custom_call.1} parent=1 // pred_check_branch
      %41 = sbr.rel (0) target = $region13
    $region12: #{tpu_custom_call.1} parent=1 // pred_region
      %43 = vsyncadd [#allocation7], 0
      %s44 = sshll.u32 %s2, 4
      %s45 = int_to_ptr.hbm [resolvable:$true] %s44
      %s46 = sshll.u32 [#allocation8], 4
      %s47 = int_to_ptr.vmem [resolvable:$true] %s46
      %52 = dma.hbm_to_vmem [thread:$0]  %s45, 256, %s47, [#allocation7], 128, 128, 8
    $region13: #{tpu_custom_call.1} parent=1 // pred_fallthru
      _
    // Predicated region
    $region14: #{tpu_custom_call.1} parent=1 // pred_check
      _
    $region15: #{tpu_custom_call.1} parent=1 // pred_check_branch
      %54 = sbr.rel (0) target = $region17
    $region16: #{tpu_custom_call.1} parent=1 // pred_region
      _
    $region17: #{tpu_custom_call.1} parent=1 // pred_fallthru
      _
    // Predicated region
    $region18: #{tpu_custom_call.1} parent=1 // pred_check
      _
    $region19: #{tpu_custom_call.1} parent=1 // pred_check_branch
      %56 = sbr.rel (0) target = $region21
    $region20: #{tpu_custom_call.1} parent=1 // pred_region
      _
    $region21: #{tpu_custom_call.1} parent=1 // pred_fallthru
      _
    // Predicated region
    $region22: #{tpu_custom_call.1} parent=1 // pred_check
      _
    $region23: #{tpu_custom_call.1} parent=1 // pred_check_branch
      %58 = sbr.rel (0) target = $region25
    $region24: #{tpu_custom_call.1} parent=1 // pred_region
      %60 = dma.done [#allocation4], 256
    $region25: #{tpu_custom_call.1} parent=1 // pred_fallthru
      _
    // Predicated region
    $region26: #{tpu_custom_call.1} parent=1 // pred_check
      _
    $region27: #{tpu_custom_call.1} parent=1 // pred_check_branch
      %62 = sbr.rel (0) target = $region29
    $region28: #{tpu_custom_call.1} parent=1 // pred_region
      %64 = dma.done [#allocation7], 256
    $region29: #{tpu_custom_call.1} parent=1 // pred_fallthru
      _
    // Predicated region
    $region30: #{tpu_custom_call.1} parent=1 // pred_check
      _
    $region31: #{tpu_custom_call.1} parent=1 // pred_check_branch
      %66 = sbr.rel (0) target = $region33
    $region32: #{tpu_custom_call.1} parent=1 // pred_region
      %68 = dma.done [#allocation7], 256
    $region33: #{tpu_custom_call.1} parent=1 // pred_fallthru
      _
    %v69 = vld [vmem:[%s3] sm:$0x1]
    %s70 = sld [smem:[#allocation2]]
    %v71 = vld [vmem:[#allocation3] sm:$0xff]
    %v72 = vld [vmem:[#allocation3 + $0x8] sm:$0xff]
    %v73 = vld [vmem:[#allocation6] sm:$0xff]
    %v74 = vld [vmem:[#allocation6 + $0x8] sm:$0xff]
    %v75 = vld [vmem:[#allocation8] sm:$0xff]
    %v76 = vld [vmem:[#allocation8 + $0x8] sm:$0xff]
    %v78 = vperm.slane %v69, 0
    %v80 = vmul.f32 %v71, %v78
    %v81 = vmul.f32 %v72, %v78
    %vm82 = vcmask 261120
    %v83 = vsel %vm82, %v80, 0.0
    %84 = vadd.xlane.f32.xlu0 %v83
    %v85 = vpop.xlane.xlu0 %84
    %v86 = vsel %vm82, %v81, 0.0
    %87 = vadd.xlane.f32.xlu0 %v86
    %v88 = vpop.xlane.xlu0 %87
    %v89 = vstv %s70
    %v90 = vadd.f32 %v85, %v89
    %v91 = vadd.f32 %v88, %v89
    %v92 = vmax.f32 %v90, 0.0
    %v93 = vmax.f32 %v91, 0.0
    %v94 = vmul.f32 %v73, %v78
    %v95 = vmul.f32 %v74, %v78
    %v96 = vsel %vm82, %v94, 0.0
    %97 = vadd.xlane.f32.xlu0 %v96
    %v98 = vpop.xlane.xlu0 %97
    %v99 = vsel %vm82, %v95, 0.0
    %100 = vadd.xlane.f32.xlu0 %v99
    %v101 = vpop.xlane.xlu0 %100
    %v102 = vadd.f32 %v98, %v89
    %v103 = vadd.f32 %v101, %v89
    %v104 = vmax.f32 %v102, 0.0
    %v105 = vmax.f32 %v103, 0.0
    %v106 = vmul.f32 %v75, %v78
    %v107 = vmul.f32 %v76, %v78
    %v108 = vsel %vm82, %v106, 0.0
    %109 = vadd.xlane.f32.xlu0 %v108
    %v110 = vpop.xlane.xlu0 %109
    %v111 = vsel %vm82, %v107, 0.0
    %112 = vadd.xlane.f32.xlu0 %v111
    %v113 = vpop.xlane.xlu0 %112
    %v114 = vadd.f32 %v110, %v89
    %v115 = vadd.f32 %v113, %v89
    %v116 = vmax.f32 %v114, 0.0
    %v117 = vmax.f32 %v115, 0.0
    %v118 = vmax.f32 %v92, %v104
    %v119 = vmax.f32 %v93, %v105
    %v120 = vmax.f32 %v118, %v116
    %v121 = vmax.f32 %v119, %v117
    %v122 = vsub.f32 %v92, %v120
    %v123 = vsub.f32 %v93, %v121
    %v124 = vmul.f32 %v122, 1.442695
    %v125 = vpow.pop %v124
    %v126 = vmul.f32 %v123, 1.442695
    %v127 = vpow.pop %v126
    %v128 = vsub.f32 %v104, %v120
    %v129 = vsub.f32 %v105, %v121
    %v130 = vmul.f32 %v128, 1.442695
    %v131 = vpow.pop %v130
    %v132 = vmul.f32 %v129, 1.442695
    %v133 = vpow.pop %v132
    %v134 = vsub.f32 %v116, %v120
    %v135 = vsub.f32 %v117, %v121
    %v136 = vmul.f32 %v134, 1.442695
    %v137 = vpow.pop %v136
    %v138 = vmul.f32 %v135, 1.442695
    %v139 = vpow.pop %v138
    %v140 = vadd.f32 %v125, %v131
    %v141 = vadd.f32 %v127, %v133
    %v142 = vadd.f32 %v140, %v137
    %v143 = vadd.f32 %v141, %v139
    %v144 = vrcp.pop %v142
    %v145 = vmul.f32 %v142, %v144
    %v146 = vsub.f32 1.0, %v145
    %v147 = vmul.f32 %v144, %v146
    %v148 = vadd.f32 %v144, %v147
    %vm149 = vweird.f32 %v142
    %vm150 = vweird.f32 %v144
    %vm151 = vmor %vm149, %vm150
    %v152 = vsel %vm151, %v144, %v148
    %v153 = vand.u32 2147483647, %v142
    %vm154 = vcmp.eq.f32.partialorder %v153, 8.507059e+37
    %v155 = vand.u32 %v142, 2147483648
    %v156 = vor.u32 1.1754944e-38, %v155
    %v157 = vsel %vm154, %v156, %v152
    %v158 = vrcp.pop %v143
    %v159 = vmul.f32 %v143, %v158
    %v160 = vsub.f32 1.0, %v159
    %v161 = vmul.f32 %v158, %v160
    %v162 = vadd.f32 %v158, %v161
    %vm163 = vweird.f32 %v143
    %vm164 = vweird.f32 %v158
    %vm165 = vmor %vm163, %vm164
    %v166 = vsel %vm165, %v158, %v162
    %v167 = vand.u32 2147483647, %v143
    %vm168 = vcmp.eq.f32.partialorder %v167, 8.507059e+37
    %v169 = vand.u32 %v143, 2147483648
    %v170 = vor.u32 1.1754944e-38, %v169
    %v171 = vsel %vm168, %v170, %v166
    %v172 = vmul.f32 %v125, %v157
    %v173 = vmul.f32 %v127, %v171
    %v174 = vmul.f32 %v131, %v157
    %v175 = vmul.f32 %v133, %v171
    %v176 = vmul.f32 %v137, %v157
    %v177 = vmul.f32 %v139, %v171
    %v178 = vmul.f32 %v172, %v71
    %v179 = vmul.f32 %v173, %v72
    %v180 = vmul.f32 %v174, %v73
    %v181 = vmul.f32 %v175, %v74
    %v182 = vadd.f32 %v178, %v180
    %v183 = vadd.f32 %v179, %v181
    %v184 = vmul.f32 %v176, %v75
    %v185 = vmul.f32 %v177, %v76
    %v186 = vadd.f32 %v182, %v184
    %v187 = vadd.f32 %v183, %v185
    %188 = vst.msk [vmem:[#allocation9] sm:$0xff] %vm82, %v186
    %189 = vst.msk [vmem:[#allocation9 + $0x8] sm:$0xff] %vm82, %v187
    // Predicated region
    $region34: #{tpu_custom_call.1} parent=1 // pred_check
      _
    $region35: #{tpu_custom_call.1} parent=1 // pred_check_branch
      %191 = sbr.rel (0) target = $region37
    $region36: #{tpu_custom_call.1} parent=1 // pred_region
      %193 = vsyncadd [#allocation5], 0
      %s194 = sshll.u32 [#allocation9], 4
      %s195 = int_to_ptr.vmem [resolvable:$true] %s194
      %s196 = sshll.u32 %s5, 4
      %s197 = int_to_ptr.hbm [resolvable:$true] %s196
      %202 = dma.vmem_to_hbm [thread:$0]  %s195, 256, %s197, [#allocation5], 128, 128, 8
    $region37: #{tpu_custom_call.1} parent=1 // pred_fallthru
      _
    // Predicated region
    $region38: #{tpu_custom_call.1} parent=1 // pred_check
      _
    $region39: #{tpu_custom_call.1} parent=1 // pred_check_branch
      %204 = sbr.rel (0) target = $region41
    $region40: #{tpu_custom_call.1} parent=1 // pred_region
      %206 = dma.done [#allocation5], 256
    $region41: #{tpu_custom_call.1} parent=1 // pred_fallthru
      _
    %207 = vsyncpa [#allocation4], 1
    %208 = vsyncpa [#allocation7], 1
    %209 = vsyncpa [#allocation5], 1

</llo_original>
